<compile_context>
chip_gen: v6e
topology: v6e:2x2x1
jax: 0.10.0
libtpu: 0.0.40
codegen_flags: <defaults>
</compile_context>

<pallas_src>
import jax
import jax.numpy as jnp
from jax import lax
from jax.experimental import pallas as pl
from jax.experimental.pallas import tpu as pltpu


def _basic_block_kernel(x_ref, b1_ref, sb1_ref, b2_ref, sb2_ref, out_ref):
    """Fused BasicBlock forward for one batch image.

    x_ref  : (1, H+4, W*Cin)     lane-dense f32 input rows, H zero-padded by 2/side
    b1_ref : (3*W*Cin, W*Cmid)   bf16 conv1 weights, kh bands stacked along K
                                 (kw taps + w-direction zero padding baked in)
    sb1_ref: (2, W*Cmid)         folded BN1 [scale; bias] (f32), lane layout
    b2_ref : (3*W*Cmid, W*Cout)  bf16 conv2 weights
    sb2_ref: (2, W*Cout)         folded BN2 [scale; bias] (f32)
    out_ref: (1, H, W*Cout)      lane-dense f32 output rows
    """
    H = out_ref.shape[1]

    # Row-shifted views of the padded input, read straight from the resident ref.
    x0 = x_ref[0, 0:H + 2, :]            # padded rows 0 .. H+1   (kh = 0)
    x1 = x_ref[0, 1:H + 3, :]            # padded rows 1 .. H+2   (kh = 1)
    x2 = x_ref[0, 2:H + 4, :]            # padded rows 2 .. H+3   (kh = 2)

    # ---- conv1 (3x3, pad 1) + BN1 + ReLU on H+2 extended rows (1-row halo/side).
    # Single MXU matmul: M = H+2, K = 3*W*Cin, N = W*Cmid; bf16 operands, f32 acc.
    a1 = jnp.concatenate([x0, x1, x2], axis=-1).astype(jnp.bfloat16)
    acc1 = jnp.dot(a1, b1_ref[...], preferred_element_type=jnp.float32)
    y = jnp.maximum(acc1 * sb1_ref[0:1, :] + sb1_ref[1:2, :], 0.0)

    # Extended rows 0 and H+1 lie outside the image; zeroing them reproduces
    # conv2's h-direction zero padding exactly.
    row = lax.broadcasted_iota(jnp.int32, y.shape, 0)
    y = jnp.where((row >= 1) & (row <= H), y, 0.0)

    # ---- conv2 (3x3, pad 1) + BN2.  Output row l reads y extended rows l..l+2.
    # Single MXU matmul: M = H, K = 3*W*Cmid, N = W*Cout.
    a2 = jnp.concatenate([y[0:H], y[1:H + 1], y[2:H + 2]],
                         axis=-1).astype(jnp.bfloat16)
    acc2 = jnp.dot(a2, b2_ref[...], preferred_element_type=jnp.float32)
    out = acc2 * sb2_ref[0:1, :] + sb2_ref[1:2, :]

    # ---- residual add (exact f32 input rows, already resident) + ReLU.
    out = out + x2[0:H, :]
    out_ref[0] = jnp.maximum(out, 0.0).astype(out_ref.dtype)


def _banded_conv_weights(w_oihw, width):
    """OIHW 3x3 conv weights -> one (3*W*Cin, W*Cout) bf16 matmul weight.

    For kernel row kh: band[kh][wi*Cin + ci, wo*Cout + co] = w[co, ci, kh, kw]
    with wi = wo + kw - 1, so a lane-dense activation row (W*Cin,) @ band[kh]
    applies all three kw taps (and the w-direction zero padding) of kernel row
    kh.  The three kh bands are stacked along K so the whole 3x3 conv is a
    single K = 3*W*Cin MXU matmul.
    """
    wt = jnp.transpose(w_oihw, (2, 3, 1, 0)).astype(jnp.float32)  # (kh,kw,Ci,Co)
    bands = []
    for kh in range(3):
        b = None
        for kw in range(3):
            shift = jnp.eye(width, k=1 - kw, dtype=jnp.float32)   # wi == wo+kw-1
            term = jnp.kron(shift, wt[kh, kw])
            b = term if b is None else b + term
        bands.append(b)
    return jnp.concatenate(bands, axis=0).astype(jnp.bfloat16)    # (3*W*Ci, W*Co)


def _fold_bn_tiled(gamma, beta, mean, var, reps, eps=1e-5):
    """Fold eval-mode BN into per-channel scale/bias, tiled to (2, W*C) f32."""
    scale = gamma / jnp.sqrt(var + eps)
    bias = beta - mean * scale
    return jnp.stack([jnp.tile(scale, reps),
                      jnp.tile(bias, reps)]).astype(jnp.float32)


@jax.jit
def basic_block_forward(x_nchw, w1_oihw, bn1, w2_oihw, bn2):
    """x_nchw: (N, Cin, H, W) float32; conv weights in PyTorch OIHW layout."""
    N, Cin, H, W = x_nchw.shape
    Cmid = w1_oihw.shape[0]
    Cout = w2_oihw.shape[0]
    # stride=1 / downsample=None config: residual add needs matching channels.
    assert Cin == Cmid == Cout, "BasicBlock without downsample needs Cin == Cout"

    # NCHW -> NHWC -> lane-dense rows (N, H, W*Cin); zero-pad H by 2 per side
    # (1 for conv1's own padding + 1 so conv1's halo rows -- which become conv2's
    # zero padding after masking -- are computed in place).
    x_rows = jnp.transpose(x_nchw, (0, 2, 3, 1)).reshape(N, H, W * Cin)
    x_pad = jnp.pad(x_rows, ((0, 0), (2, 2), (0, 0)))

    b1 = _banded_conv_weights(w1_oihw, W)      # (3*W*Cin,  W*Cmid) bf16
    b2 = _banded_conv_weights(w2_oihw, W)      # (3*W*Cmid, W*Cout) bf16
    sb1 = _fold_bn_tiled(*bn1, reps=W)         # (2, W*Cmid) f32
    sb2 = _fold_bn_tiled(*bn2, reps=W)         # (2, W*Cout) f32

    # One grid step per image: minimal per-step overhead on single-TC v5e/v6e,
    # and N >= 2 "parallel" steps feed both v7x TensorCores.
    # (If N == 1 on v7x, split H into two halo-overlapped tiles instead.)
    out_rows = pl.pallas_call(
        _basic_block_kernel,
        out_shape=jax.ShapeDtypeStruct((N, H, W * Cout), x_nchw.dtype),
        grid_spec=pltpu.PrefetchScalarGridSpec(
            num_scalar_prefetch=0,
            grid=(N,),
            in_specs=[
                # Whole padded image of this step; it also provides the residual,
                # so there is no second residual input stream.
                pl.BlockSpec((1, H + 4, W * Cin), lambda n: (n, 0, 0)),
                # Grid-invariant weights / folded BN (tiny at W*C = 128).
                pl.BlockSpec((3 * W * Cin, W * Cmid), lambda n: (0, 0)),
                pl.BlockSpec((2, W * Cmid), lambda n: (0, 0)),
                pl.BlockSpec((3 * W * Cmid, W * Cout), lambda n: (0, 0)),
                pl.BlockSpec((2, W * Cout), lambda n: (0, 0)),
            ],
            out_specs=pl.BlockSpec((1, H, W * Cout), lambda n: (n, 0, 0)),
        ),
        compiler_params=pltpu.CompilerParams(
            dimension_semantics=("parallel",),
            vmem_limit_bytes=32 * 1024 * 1024),
    )(x_pad, b1, sb1, b2, sb2)

    # (N, H, W*Cout) -> NCHW to match the PyTorch module's output convention.
    return jnp.transpose(out_rows.reshape(N, H, W, Cout), (0, 3, 1, 2))


def _reference_forward(x_nchw, w1, bn1, w2, bn2):
    """Pure-JAX f32 reference mirroring the PyTorch module (BN in eval mode)."""
    def conv(x, w):
        return lax.conv_general_dilated(
            x, w, window_strides=(1, 1), padding="SAME",
            dimension_numbers=("NCHW", "OIHW", "NCHW"))

    def bn(x, params, eps=1e-5):
        gamma, beta, mean, var = params
        sh = (1, -1, 1, 1)
        return (x - mean.reshape(sh)) / jnp.sqrt(var.reshape(sh) + eps) \
            * gamma.reshape(sh) + beta.reshape(sh)

    out = jax.nn.relu(bn(conv(x_nchw, w1), bn1))
    out = bn(conv(out, w2), bn2)
    out = out + x_nchw
    return jax.nn.relu(out)


if __name__ == "__main__":
    key = jax.random.PRNGKey(0)
    k_x, k_w1, k_w2, k_b1, k_b2 = jax.random.split(key, 5)

    # in_planes = planes = 8, stride = 1, no downsample; W * C = 128 (lane-dense).
    N, C, H, W = 2, 8, 16, 16
    x = jax.random.normal(k_x, (N, C, H, W), jnp.float32)

    # Deterministic parameter init (shapes from BasicBlock.__init__).
    w1 = jax.random.normal(k_w1, (C, C, 3, 3), jnp.float32) * 0.1
    w2 = jax.random.normal(k_w2, (C, C, 3, 3), jnp.float32) * 0.1
    bn1 = (jnp.ones((C,)) * 1.1,                           # gamma
           jnp.full((C,), 0.05),                           # beta
           jax.random.normal(k_b1, (C,)) * 0.1,            # running_mean
           jnp.abs(jax.random.normal(k_b2, (C,))) + 0.5)   # running_var
    bn2 = (jnp.ones((C,)) * 0.9,
           jnp.full((C,), -0.02),
           jax.random.normal(k_b2, (C,)) * 0.1,
           jnp.abs(jax.random.normal(k_b1, (C,))) + 0.5)

    out = basic_block_forward(x, w1, bn1, w2, bn2)
    jax.block_until_ready(out)

    ref = _reference_forward(x, w1, bn1, w2, bn2)
    assert out.shape == (N, C, H, W)
    # bf16 MXU operands (f32 accumulation + f32 epilogue + exact f32 residual):
    # tolerance relaxed vs. the previous all-f32 path accordingly.
    max_err = float(jnp.max(jnp.abs(out - ref)))
    assert jnp.allclose(out, ref, atol=5e-2, rtol=5e-2), max_err

    print("KERNEL_OK")
</pallas_src>

<mosaic_0001>
module attributes {stable_mosaic.version = 11 : i64} {
  func.func @_basic_block_kernel(%arg0: i32, %arg1: memref<1x20x128xf32, #tpu.memory_space<vmem>>, %arg2: memref<384x128xbf16, #tpu.memory_space<vmem>>, %arg3: memref<2x128xf32, #tpu.memory_space<vmem>>, %arg4: memref<384x128xbf16, #tpu.memory_space<vmem>>, %arg5: memref<2x128xf32, #tpu.memory_space<vmem>>, %arg6: memref<1x16x128xf32, #tpu.memory_space<vmem>>) attributes {dimension_semantics = [#tpu.dimension_semantics<parallel>], iteration_bounds = array<i64: 2>, scalar_prefetch = 0 : i64, scratch_operands = 0 : i64, tpu.core_type = #tpu.core_type<tc>, window_params = [{transform_indices = @transform_0, window_bounds = array<i64: 1, 20, 128>}, {pipeline_mode = #tpu.pipeline_mode<synchronous>, transform_indices = @transform_1, window_bounds = array<i64: 384, 128>}, {pipeline_mode = #tpu.pipeline_mode<synchronous>, transform_indices = @transform_2, window_bounds = array<i64: 2, 128>}, {pipeline_mode = #tpu.pipeline_mode<synchronous>, transform_indices = @transform_3, window_bounds = array<i64: 384, 128>}, {pipeline_mode = #tpu.pipeline_mode<synchronous>, transform_indices = @transform_4, window_bounds = array<i64: 2, 128>}, {transform_indices = @transform_5, window_bounds = array<i64: 1, 16, 128>}]} {
    %c0 = arith.constant 0 : index
    %c0_0 = arith.constant 0 : index
    %c0_1 = arith.constant 0 : index
    %0 = vector.load %arg1[%c0, %c0_0, %c0_1] : memref<1x20x128xf32, #tpu.memory_space<vmem>>, vector<1x18x128xf32>
    %1 = vector.shape_cast %0 : vector<1x18x128xf32> to vector<18x128xf32>
    %c0_2 = arith.constant 0 : index
    %c1 = arith.constant 1 : index
    %c0_3 = arith.constant 0 : index
    %2 = vector.load %arg1[%c0_2, %c1, %c0_3] : memref<1x20x128xf32, #tpu.memory_space<vmem>>, vector<1x18x128xf32>
    %3 = vector.shape_cast %2 : vector<1x18x128xf32> to vector<18x128xf32>
    %c0_4 = arith.constant 0 : index
    %c2 = arith.constant 2 : index
    %c0_5 = arith.constant 0 : index
    %4 = vector.load %arg1[%c0_4, %c2, %c0_5] : memref<1x20x128xf32, #tpu.memory_space<vmem>>, vector<1x18x128xf32>
    %5 = vector.shape_cast %4 : vector<1x18x128xf32> to vector<18x128xf32>
    %6 = tpu.concatenate %1, %3, %5 in 1 : vector<18x128xf32>, vector<18x128xf32>, vector<18x128xf32> -> vector<18x384xf32>
    %7 = arith.truncf %6 : vector<18x384xf32> to vector<18x384xbf16>
    %c0_6 = arith.constant 0 : index
    %c0_7 = arith.constant 0 : index
    %8 = vector.load %arg2[%c0_6, %c0_7] : memref<384x128xbf16, #tpu.memory_space<vmem>>, vector<384x128xbf16>
    %cst = arith.constant dense<0.000000e+00> : vector<18x128xf32>
    %9 = tpu.matmul %7, %8, %cst {dimension_numbers = #tpu.dot_dimension_numbers<[1], [0], [0], [1], [0, 0, 1, 1], [], []>} : vector<18x384xbf16>, vector<384x128xbf16>, vector<18x128xf32> -> vector<18x128xf32>
    %c0_8 = arith.constant 0 : index
    %c0_9 = arith.constant 0 : index
    %10 = vector.load %arg3[%c0_8, %c0_9] : memref<2x128xf32, #tpu.memory_space<vmem>>, vector<1x128xf32>
    %11 = vector.broadcast %10 : vector<1x128xf32> to vector<18x128xf32>
    %12 = arith.mulf %9, %11 : vector<18x128xf32>
    %c1_10 = arith.constant 1 : index
    %c0_11 = arith.constant 0 : index
    %13 = vector.load %arg3[%c1_10, %c0_11] : memref<2x128xf32, #tpu.memory_space<vmem>>, vector<1x128xf32>
    %14 = vector.broadcast %13 : vector<1x128xf32> to vector<18x128xf32>
    %15 = arith.addf %12, %14 : vector<18x128xf32>
    %cst_12 = arith.constant 0.000000e+00 : f32
    %16 = vector.broadcast %cst_12 : f32 to vector<18x128xf32>
    %17 = arith.maximumf %15, %16 : vector<18x128xf32>
    %18 = tpu.iota {dimensions = array<i32: 0>} : vector<18x128xi32>
    %c1_i32 = arith.constant 1 : i32
    %19 = vector.broadcast %c1_i32 : i32 to vector<18x128xi32>
    %20 = arith.cmpi sge, %18, %19 : vector<18x128xi32>
    %c16_i32 = arith.constant 16 : i32
    %21 = vector.broadcast %c16_i32 : i32 to vector<18x128xi32>
    %22 = arith.cmpi sle, %18, %21 : vector<18x128xi32>
    %23 = arith.andi %20, %22 : vector<18x128xi1>
    %cst_13 = arith.constant 0.000000e+00 : f32
    %24 = vector.broadcast %cst_13 : f32 to vector<18x128xf32>
    %25 = arith.select %23, %17, %24 : vector<18x128xi1>, vector<18x128xf32>
    %26 = vector.extract_strided_slice %25 {offsets = [0, 0], sizes = [16, 128], strides = [1, 1]} : vector<18x128xf32> to vector<16x128xf32>
    %27 = vector.extract_strided_slice %25 {offsets = [1, 0], sizes = [16, 128], strides = [1, 1]} : vector<18x128xf32> to vector<16x128xf32>
    %28 = vector.extract_strided_slice %25 {offsets = [2, 0], sizes = [16, 128], strides = [1, 1]} : vector<18x128xf32> to vector<16x128xf32>
    %29 = tpu.concatenate %26, %27, %28 in 1 : vector<16x128xf32>, vector<16x128xf32>, vector<16x128xf32> -> vector<16x384xf32>
    %30 = arith.truncf %29 : vector<16x384xf32> to vector<16x384xbf16>
    %c0_14 = arith.constant 0 : index
    %c0_15 = arith.constant 0 : index
    %31 = vector.load %arg4[%c0_14, %c0_15] : memref<384x128xbf16, #tpu.memory_space<vmem>>, vector<384x128xbf16>
    %cst_16 = arith.constant dense<0.000000e+00> : vector<16x128xf32>
    %32 = tpu.matmul %30, %31, %cst_16 {dimension_numbers = #tpu.dot_dimension_numbers<[1], [0], [0], [1], [0, 0, 1, 1], [], []>} : vector<16x384xbf16>, vector<384x128xbf16>, vector<16x128xf32> -> vector<16x128xf32>
    %c0_17 = arith.constant 0 : index
    %c0_18 = arith.constant 0 : index
    %33 = vector.load %arg5[%c0_17, %c0_18] : memref<2x128xf32, #tpu.memory_space<vmem>>, vector<1x128xf32>
    %34 = vector.broadcast %33 : vector<1x128xf32> to vector<16x128xf32>
    %35 = arith.mulf %32, %34 : vector<16x128xf32>
    %c1_19 = arith.constant 1 : index
    %c0_20 = arith.constant 0 : index
    %36 = vector.load %arg5[%c1_19, %c0_20] : memref<2x128xf32, #tpu.memory_space<vmem>>, vector<1x128xf32>
    %37 = vector.broadcast %36 : vector<1x128xf32> to vector<16x128xf32>
    %38 = arith.addf %35, %37 : vector<16x128xf32>
    %39 = vector.extract_strided_slice %5 {offsets = [0, 0], sizes = [16, 128], strides = [1, 1]} : vector<18x128xf32> to vector<16x128xf32>
    %40 = arith.addf %38, %39 : vector<16x128xf32>
    %cst_21 = arith.constant 0.000000e+00 : f32
    %41 = vector.broadcast %cst_21 : f32 to vector<16x128xf32>
    %42 = arith.maximumf %40, %41 : vector<16x128xf32>
    %c0_22 = arith.constant 0 : index
    %c0_23 = arith.constant 0 : index
    %c0_24 = arith.constant 0 : index
    %43 = vector.load %arg6[%c0_22, %c0_23, %c0_24] : memref<1x16x128xf32, #tpu.memory_space<vmem>>, vector<1x16x128xf32>
    %44 = vector.shape_cast %43 : vector<1x16x128xf32> to vector<16x128xf32>
    %45 = vector.shape_cast %42 : vector<16x128xf32> to vector<1x16x128xf32>
    tpu.vector_store %arg6[%c0_22, %c0_23, %c0_24], %45 {strides = array<i32>} : memref<1x16x128xf32, #tpu.memory_space<vmem>>, vector<1x16x128xf32>,
    return
  }
  func.func @transform_0(%arg0: i32) -> (i32, i32, i32) {
    %c0_i32 = arith.constant 0 : i32
    %c0_i32_0 = arith.constant 0 : i32
    %c0_i32_1 = arith.constant 0 : i32
    return %arg0, %c0_i32, %c0_i32_0 : i32, i32, i32
  }
  func.func @transform_1(%arg0: i32) -> (i32, i32) {
    %c0_i32 = arith.constant 0 : i32
    %c0_i32_0 = arith.constant 0 : i32
    %c0_i32_1 = arith.constant 0 : i32
    return %c0_i32, %c0_i32_0 : i32, i32
  }
  func.func @transform_2(%arg0: i32) -> (i32, i32) {
    %c0_i32 = arith.constant 0 : i32
    %c0_i32_0 = arith.constant 0 : i32
    %c0_i32_1 = arith.constant 0 : i32
    return %c0_i32, %c0_i32_0 : i32, i32
  }
  func.func @transform_3(%arg0: i32) -> (i32, i32) {
    %c0_i32 = arith.constant 0 : i32
    %c0_i32_0 = arith.constant 0 : i32
    %c0_i32_1 = arith.constant 0 : i32
    return %c0_i32, %c0_i32_0 : i32, i32
  }
  func.func @transform_4(%arg0: i32) -> (i32, i32) {
    %c0_i32 = arith.constant 0 : i32
    %c0_i32_0 = arith.constant 0 : i32
    %c0_i32_1 = arith.constant 0 : i32
    return %c0_i32, %c0_i32_0 : i32, i32
  }
  func.func @transform_5(%arg0: i32) -> (i32, i32, i32) {
    %c0_i32 = arith.constant 0 : i32
    %c0_i32_0 = arith.constant 0 : i32
    %c0_i32_1 = arith.constant 0 : i32
    return %arg0, %c0_i32, %c0_i32_0 : i32, i32, i32
  }
}

</mosaic_0001>

<llo_original>
// kernel: tile.23
$region0: #{tile.23}
  #allocation0 [shape = 's32[1]{0}', space=sflag, size = 0x4, scoped, tag = 'scoped memory for tile.23']
  %s0 = inlined_call_operand.vmem [shape: f32[8], index: 0, kind: input, shape index: {}]
  %s1 = inlined_call_operand.vmem [shape: f32[16,8], index: 1, kind: output, shape index: {}]
  // Predicated region
  $region2: #{tile.23} parent=0 // pred_check
    _
  $region3: #{tile.23} parent=0 // pred_check_branch
    %3 = sbr.rel (0) target = $region5
  $region4: #{tile.23} parent=0 // pred_region
    _
  $region5: #{tile.23} parent=0 // pred_fallthru
    _
  %v4 = vld [vmem:[%s0] ss:$0 sm:$0xff]
  %5 = vst [vmem:[%s1] sm:$0xff] %v4
  %s6 = scalar_lea.vmem %s1, 8
  %7 = vst [vmem:[%s6] sm:$0xff] %v4

// kernel: tile.28
$region0: #{tile.28}
  %s0 = inlined_call_operand.vmem [shape: f32[16,8], index: 0, kind: input, shape index: {}]
  %s1 = inlined_call_operand.vmem [shape: f32[1,128], index: 1, kind: output, shape index: {}]
  $region1: #{tile.28} parent=0
    #allocation0 [shape = 'u8[4096]{0}', space=vmem, size = 0x1000, scoped, tag = 'scoped mem for output reshape']
    %v2 = vld [vmem:[%s0] sm:$0x1]
    %vm3 = vcmask 64512
    %4 = vst.msk [vmem:[#allocation0] sm:$0x1] %vm3, %v2
    %s5 = scalar_lea.vmem %s0, 15
    %v6 = vld [vmem:[%s5] sm:$0x1]
    %7 = vrot.lane.b32.xlu0 %v6, 120
    %v8 = vpop.permute.xlu0 %7
    %vm9 = vcmask 1048512
    %10 = vst.msk [vmem:[#allocation0] sm:$0x1] %vm9, %v8
    %s11 = scalar_lea.vmem %s0, 14
    %v12 = vld [vmem:[%s11] sm:$0x1]
    %13 = vrot.lane.b32.xlu0 %v12, 112
    %v14 = vpop.permute.xlu0 %13
    %vm15 = vcmask 982912
    %16 = vst.msk [vmem:[#allocation0] sm:$0x1] %vm15, %v14
    %s17 = scalar_lea.vmem %s0, 13
    %v18 = vld [vmem:[%s17] sm:$0x1]
    %19 = vrot.lane.b32.xlu0 %v18, 104
    %v20 = vpop.permute.xlu0 %19
    %vm21 = vcmask 917312
    %22 = vst.msk [vmem:[#allocation0] sm:$0x1] %vm21, %v20
    %s23 = scalar_lea.vmem %s0, 12
    %v24 = vld [vmem:[%s23] sm:$0x1]
    %25 = vrot.lane.b32.xlu0 %v24, 96
    %v26 = vpop.permute.xlu0 %25
    %vm27 = vcmask 851712
    %28 = vst.msk [vmem:[#allocation0] sm:$0x1] %vm27, %v26
    %s29 = scalar_lea.vmem %s0, 11
    %v30 = vld [vmem:[%s29] sm:$0x1]
    %31 = vrot.lane.b32.xlu0 %v30, 88
    %v32 = vpop.permute.xlu0 %31
    %vm33 = vcmask 786112
    %34 = vst.msk [vmem:[#allocation0] sm:$0x1] %vm33, %v32
    %s35 = scalar_lea.vmem %s0, 10
    %v36 = vld [vmem:[%s35] sm:$0x1]
    %37 = vrot.lane.b32.xlu0 %v36, 80
    %v38 = vpop.permute.xlu0 %37
    %vm39 = vcmask 720512
    %40 = vst.msk [vmem:[#allocation0] sm:$0x1] %vm39, %v38
    %s41 = scalar_lea.vmem %s0, 9
    %v42 = vld [vmem:[%s41] sm:$0x1]
    %43 = vrot.lane.b32.xlu0 %v42, 72
    %v44 = vpop.permute.xlu0 %43
    %vm45 = vcmask 654912
    %46 = vst.msk [vmem:[#allocation0] sm:$0x1] %vm45, %v44
    %s47 = scalar_lea.vmem %s0, 8
    %v48 = vld [vmem:[%s47] sm:$0x1]
    %49 = vrot.lane.b32.xlu0 %v48, 64
    %v50 = vpop.permute.xlu0 %49
    %vm51 = vcmask 589312
    %52 = vst.msk [vmem:[#allocation0] sm:$0x1] %vm51, %v50
    %s53 = scalar_lea.vmem %s0, 7
    %v54 = vld [vmem:[%s53] sm:$0x1]
    %55 = vrot.lane.b32.xlu0 %v54, 56
    %v56 = vpop.permute.xlu0 %55
    %vm57 = vcmask 523712
    %58 = vst.msk [vmem:[#allocation0] sm:$0x1] %vm57, %v56
    %s59 = scalar_lea.vmem %s0, 6
    %v60 = vld [vmem:[%s59] sm:$0x1]
    %61 = vrot.lane.b32.xlu0 %v60, 48
    %v62 = vpop.permute.xlu0 %61
    %vm63 = vcmask 458112
    %64 = vst.msk [vmem:[#allocation0] sm:$0x1] %vm63, %v62
    %s65 = scalar_lea.vmem %s0, 5
    %v66 = vld [vmem:[%s65] sm:$0x1]
    %67 = vrot.lane.b32.xlu0 %v66, 40
    %v68 = vpop.permute.xlu0 %67
    %vm69 = vcmask 392512
    %70 = vst.msk [vmem:[#allocation0] sm:$0x1] %vm69, %v68
    %s71 = scalar_lea.vmem %s0, 4
    %v72 = vld [vmem:[%s71] sm:$0x1]
    %73 = vrot.lane.b32.xlu0 %v72, 32
    %v74 = vpop.permute.xlu0 %73
    %vm75 = vcmask 326912
    %76 = vst.msk [vmem:[#allocation0] sm:$0x1] %vm75, %v74
    %s77 = scalar_lea.vmem %s0, 3
    %v78 = vld [vmem:[%s77] sm:$0x1]
    %79 = vrot.lane.b32.xlu0 %v78, 24
    %v80 = vpop.permute.xlu0 %79
    %vm81 = vcmask 261312
    %82 = vst.msk [vmem:[#allocation0] sm:$0x1] %vm81, %v80
    %s83 = scalar_lea.vmem %s0, 2
    %v84 = vld [vmem:[%s83] sm:$0x1]
    %85 = vrot.lane.b32.xlu0 %v84, 16
    %v86 = vpop.permute.xlu0 %85
    %vm87 = vcmask 195712
    %88 = vst.msk [vmem:[#allocation0] sm:$0x1] %vm87, %v86
    %s89 = scalar_lea.vmem %s0, 1
    %v90 = vld [vmem:[%s89] sm:$0x1]
    %91 = vrot.lane.b32.xlu0 %v90, 8
    %v92 = vpop.permute.xlu0 %91
    %vm93 = vcmask 130112
    %94 = vst.msk [vmem:[#allocation0] sm:$0x1] %vm93, %v92
    %s96 = sshll.u32 1, 1
    %s97 = ssub.s32 %s96, 1
    %v99 = vld [vmem:[#allocation0] sm:%s97]
    %s100 = sshll.u32 1, 1
    %s101 = ssub.s32 %s100, 1
    %102 = vst [vmem:[%s1] sm:%s101] %v99

// kernel: basic_block_forward.1
$region0: #{basic_block_forward.1}
  #allocation0 [shape = 'u32[]', space=smem, size = 0x4, offset = 0x4, fixed_abs, tag = 'smem constant byte address 0x4 - core index']
  #allocation1 [shape = 'u32[144,128]{1,0:T(1,128)}', space=vmem, size = 0x12000, scoped, tag = 'internal scratch']
  %s0 = inlined_call_operand.vmem [shape: f32[2,20,128], index: 0, kind: input, shape index: {}]
  %s1 = inlined_call_operand.vmem [shape: bf16[384,128], index: 1, kind: input, shape index: {}]
  %s2 = inlined_call_operand.vmem [shape: f32[2,128], index: 2, kind: input, shape index: {}]
  %s3 = inlined_call_operand.vmem [shape: bf16[384,128], index: 3, kind: input, shape index: {}]
  %s4 = inlined_call_operand.vmem [shape: f32[2,128], index: 4, kind: input, shape index: {}]
  %s5 = inlined_call_operand.vmem [shape: f32[2,16,128], index: 5, kind: output, shape index: {}]
  %s6 = sld [smem:[#allocation0]]
  $region53: #{basic_block_forward.1} parent=0
    _
  %s8 = ssub.s32 1, %s6
  %s9 = scalar_select 0, %s8, %s6
  loop: start=0, step=1, limit=4
  $region2: #{basic_block_forward.1} parent=0 // loop_pre_header
    _
  $region3: #{basic_block_forward.1} parent=0 // loop_header
    %s11 = sphi 0, %s15
    %p12 = scmp.ge.s32.totalorder %s11, 4
    %s21 = sphi 0, %s23
    %s24 = sphi 0, %s21
    %s25 = sphi 0, %s24
    %s41 = sphi 0, %s25
    %s45 = sphi 0, %s45
    %s47 = sphi 0, %s45
    %s48 = sphi 0, %s47
    %s62 = sphi 0, %s48
    %s66 = sphi 0, %s66
    %s68 = sphi 0, %s66
    %s69 = sphi 0, %s68
    %s83 = sphi 0, %s69
    %s87 = sphi 0, %s87
    %s89 = sphi 0, %s87
    %s90 = sphi 0, %s89
    %s104 = sphi 0, %s90
    %s108 = sphi 0, %s108
    %s110 = sphi 0, %s108
    %s111 = sphi 0, %s110
    %s125 = sphi 0, %s111
    %s131 = sphi 0, %s133
    %s134 = sphi 0, %s131
    %s135 = sphi 0, %s134
    %s151 = sphi 0, %s135
  $region4: #{basic_block_forward.1} parent=0 // loop_header_branch
    %14 = sbr.rel (%p12) target = $region8
  $region5: #{basic_block_forward.1} parent=0 // loop_body
    %s16 = ssub.s32 %s11, 1
    %s17 = ssub.s32 %s11, 2
    %s18 = sadd.s32 %s11, 1
    %s19 = ssub.s32 %s11, %s18
    %p20 = scmp.eq.s32.totalorder %s19, 0
    %s22 = sadd.s32 %s21, 1
    %s23 = scalar_select %p20, %s21, %s22
    %p26 = pneg %p20
    %p27 = scmp.eq.s32.totalorder %s11, 1
    %p28 = por %p26, %p27
    %p29 = scmp.ne.s32.totalorder %s21, %s24
    %p30 = scmp.eq.s32.totalorder %s11, 0
    %p31 = por %p29, %p30
    %p32 = scmp.ne.s32.totalorder %s21, %s24
    %p33 = scmp.eq.s32.totalorder %s16, 1
    %p34 = por %p32, %p33
    %p35 = scmp.ne.s32.totalorder %s24, %s25
    %p36 = scmp.eq.s32.totalorder %s16, 0
    %p37 = por %p35, %p36
    %p38 = scmp.ne.s32.totalorder %s24, %s25
    %p39 = scmp.eq.s32.totalorder %s17, 1
    %p40 = por %p38, %p39
    %p42 = scmp.ne.s32.totalorder %s25, %s41
    %p43 = scmp.eq.s32.totalorder %s17, 0
    %p44 = por %p42, %p43
    %s46 = sadd.s32 %s45, 1
    %p49 = scmp.eq.s32.totalorder %s11, 1
    %p50 = scmp.ne.s32.totalorder %s45, %s47
    %p51 = scmp.eq.s32.totalorder %s11, 0
    %p52 = por %p50, %p51
    %p53 = scmp.ne.s32.totalorder %s45, %s47
    %p54 = scmp.eq.s32.totalorder %s16, 1
    %p55 = por %p53, %p54
    %p56 = scmp.ne.s32.totalorder %s47, %s48
    %p57 = scmp.eq.s32.totalorder %s16, 0
    %p58 = por %p56, %p57
    %p59 = scmp.ne.s32.totalorder %s47, %s48
    %p60 = scmp.eq.s32.totalorder %s17, 1
    %p61 = por %p59, %p60
    %p63 = scmp.ne.s32.totalorder %s48, %s62
    %p64 = scmp.eq.s32.totalorder %s17, 0
    %p65 = por %p63, %p64
    %s67 = sadd.s32 %s66, 1
    %p70 = scmp.eq.s32.totalorder %s11, 1
    %p71 = scmp.ne.s32.totalorder %s66, %s68
    %p72 = scmp.eq.s32.totalorder %s11, 0
    %p73 = por %p71, %p72
    %p74 = scmp.ne.s32.totalorder %s66, %s68
    %p75 = scmp.eq.s32.totalorder %s16, 1
    %p76 = por %p74, %p75
    %p77 = scmp.ne.s32.totalorder %s68, %s69
    %p78 = scmp.eq.s32.totalorder %s16, 0
    %p79 = por %p77, %p78
    %p80 = scmp.ne.s32.totalorder %s68, %s69
    %p81 = scmp.eq.s32.totalorder %s17, 1
    %p82 = por %p80, %p81
    %p84 = scmp.ne.s32.totalorder %s69, %s83
    %p85 = scmp.eq.s32.totalorder %s17, 0
    %p86 = por %p84, %p85
    %s88 = sadd.s32 %s87, 1
    %p91 = scmp.eq.s32.totalorder %s11, 1
    %p92 = scmp.ne.s32.totalorder %s87, %s89
    %p93 = scmp.eq.s32.totalorder %s11, 0
    %p94 = por %p92, %p93
    %p95 = scmp.ne.s32.totalorder %s87, %s89
    %p96 = scmp.eq.s32.totalorder %s16, 1
    %p97 = por %p95, %p96
    %p98 = scmp.ne.s32.totalorder %s89, %s90
    %p99 = scmp.eq.s32.totalorder %s16, 0
    %p100 = por %p98, %p99
    %p101 = scmp.ne.s32.totalorder %s89, %s90
    %p102 = scmp.eq.s32.totalorder %s17, 1
    %p103 = por %p101, %p102
    %p105 = scmp.ne.s32.totalorder %s90, %s104
    %p106 = scmp.eq.s32.totalorder %s17, 0
    %p107 = por %p105, %p106
    %s109 = sadd.s32 %s108, 1
    %p112 = scmp.eq.s32.totalorder %s11, 1
    %p113 = scmp.ne.s32.totalorder %s108, %s110
    %p114 = scmp.eq.s32.totalorder %s11, 0
    %p115 = por %p113, %p114
    %p116 = scmp.ne.s32.totalorder %s108, %s110
    %p117 = scmp.eq.s32.totalorder %s16, 1
    %p118 = por %p116, %p117
    %p119 = scmp.ne.s32.totalorder %s110, %s111
    %p120 = scmp.eq.s32.totalorder %s16, 0
    %p121 = por %p119, %p120
    %p122 = scmp.ne.s32.totalorder %s110, %s111
    %p123 = scmp.eq.s32.totalorder %s17, 1
    %p124 = por %p122, %p123
    %p126 = scmp.ne.s32.totalorder %s111, %s125
    %p127 = scmp.eq.s32.totalorder %s17, 0
    %p128 = por %p126, %p127
    %s129 = ssub.s32 %s11, %s18
    %p130 = scmp.eq.s32.totalorder %s129, 0
    %s132 = sadd.s32 %s131, 1
    %s133 = scalar_select %p130, %s131, %s132
    %p136 = pneg %p130
    %p137 = scmp.eq.s32.totalorder %s11, 1
    %p138 = por %p136, %p137
    %p139 = scmp.ne.s32.totalorder %s131, %s134
    %p140 = scmp.eq.s32.totalorder %s11, 0
    %p141 = por %p139, %p140
    %p142 = scmp.ne.s32.totalorder %s131, %s134
    %p143 = scmp.eq.s32.totalorder %s16, 1
    %p144 = por %p142, %p143
    %p145 = scmp.ne.s32.totalorder %s134, %s135
    %p146 = scmp.eq.s32.totalorder %s16, 0
    %p147 = por %p145, %p146
    %p148 = scmp.ne.s32.totalorder %s134, %s135
    %p149 = scmp.eq.s32.totalorder %s17, 1
    %p150 = por %p148, %p149
    %p152 = scmp.ne.s32.totalorder %s135, %s151
    %p153 = scmp.eq.s32.totalorder %s17, 0
    %p154 = por %p152, %p153
    %p155 = scmp.le.s32.totalorder 1, %s11
    %p156 = scmp.lt.s32.totalorder %s11, 3
    %p157 = pnand %p155, %p156
    %p158 = pneg %p157
    // Predicated region
    $region9: #{basic_block_forward.1} parent=5 // pred_check
      _
    $region10: #{basic_block_forward.1} parent=5 // pred_check_branch
      %160 = sbr.rel (%p157) target = $region12
    $region11: #{basic_block_forward.1} parent=5 // pred_region
      %s161 = ssub.s32 %s11, 1
      // Predicated region
      $region13: #{basic_block_forward.1} parent=11 // pred_check
        %p162 = pneg %p58
      $region14: #{basic_block_forward.1} parent=11 // pred_check_branch
        %164 = sbr.rel (%p162) target = $region16
      $region15: #{basic_block_forward.1} parent=11 // pred_region
        _
      $region16: #{basic_block_forward.1} parent=11 // pred_fallthru
        _
      // Predicated region
      $region17: #{basic_block_forward.1} parent=11 // pred_check
        %p165 = pneg %p79
      $region18: #{basic_block_forward.1} parent=11 // pred_check_branch
        %167 = sbr.rel (%p165) target = $region20
      $region19: #{basic_block_forward.1} parent=11 // pred_region
        _
      $region20: #{basic_block_forward.1} parent=11 // pred_fallthru
        _
      // Predicated region
      $region21: #{basic_block_forward.1} parent=11 // pred_check
        %p168 = pneg %p100
      $region22: #{basic_block_forward.1} parent=11 // pred_check_branch
        %170 = sbr.rel (%p168) target = $region24
      $region23: #{basic_block_forward.1} parent=11 // pred_region
        _
      $region24: #{basic_block_forward.1} parent=11 // pred_fallthru
        _
      // Predicated region
      $region25: #{basic_block_forward.1} parent=11 // pred_check
        %p171 = pneg %p121
      $region26: #{basic_block_forward.1} parent=11 // pred_check_branch
        %173 = sbr.rel (%p171) target = $region28
      $region27: #{basic_block_forward.1} parent=11 // pred_region
        _
      $region28: #{basic_block_forward.1} parent=11 // pred_fallthru
        _
    $region12: #{basic_block_forward.1} parent=5 // pred_fallthru
      _
    %p174 = scmp.lt.s32.totalorder %s11, 2
    // Predicated region
    $region29: #{basic_block_forward.1} parent=5 // pred_check
      %p175 = pneg %p174
    $region30: #{basic_block_forward.1} parent=5 // pred_check_branch
      %177 = sbr.rel (%p175) target = $region32
    $region31: #{basic_block_forward.1} parent=5 // pred_region
      // Predicated region
      $region33: #{basic_block_forward.1} parent=31 // pred_check
        %p178 = pneg %p31
      $region34: #{basic_block_forward.1} parent=31 // pred_check_branch
        %180 = sbr.rel (%p178) target = $region36
      $region35: #{basic_block_forward.1} parent=31 // pred_region
        %p181 = scmp.lt.s32.totalorder %s11, 1
        %s182 = scalar_select %p181, %s11, 1
        %s183 = smul.addr %s182, 3
        %s184 = smul.addr %s183, 8
        %s185 = scalar_lea.vmem %s0, %s184
      $region36: #{basic_block_forward.1} parent=31 // pred_fallthru
        _
    $region32: #{basic_block_forward.1} parent=5 // pred_fallthru
      _
    %p186 = scmp.le.s32.totalorder 1, %s11
    %p187 = scmp.lt.s32.totalorder %s11, 3
    %p188 = pnand %p186, %p187
    %p189 = pneg %p188
    // Predicated region
    $region37: #{basic_block_forward.1} parent=5 // pred_check
      _
    $region38: #{basic_block_forward.1} parent=5 // pred_check_branch
      %191 = sbr.rel (%p188) target = $region40
    $region39: #{basic_block_forward.1} parent=5 // pred_region
      %s192 = ssub.s32 %s11, 1
      %p193 = scmp.lt.s32.totalorder %s16, 1
      %s194 = scalar_select %p193, %s16, 1
      %s195 = smul.addr %s194, 3
      %s196 = smul.addr %s195, 8
      %s197 = scalar_lea.vmem %s0, %s196
      %p198 = pneg %p37
      %p199 = pneg %p34
      %p200 = pneg %p58
      %p201 = pneg %p55
      %p202 = pneg %p79
      %p203 = pneg %p76
      %p204 = pneg %p100
      %p205 = pneg %p97
      %p206 = pneg %p121
      %p207 = pneg %p118
      %p208 = pneg %p147
      %p209 = pneg %p144
      %p210 = scmp.lt.s32.totalorder %s16, 1
      %s211 = scalar_select %p210, %s16, 1
      %s212 = smul.addr %s211, 2
      %s213 = smul.addr %s212, 8
      %s214 = scalar_lea.vmem %s5, %s213
      %p215 = scmp.lt.s32.totalorder %s16, 1
      %s216 = scalar_select %p215, %s16, 1
      %s217 = smul.addr %s216, 3
      %s218 = smul.addr %s217, 8
      %s219 = scalar_lea.vmem %s0, %s218
      %p220 = scmp.lt.s32.totalorder %s16, 1
      %s221 = scalar_select %p220, %s16, 1
      %s222 = smul.addr %s221, 2
      %s223 = smul.addr %s222, 8
      %s224 = scalar_lea.vmem %s5, %s223
      %v226 = vld [vmem:[%s219] sm:$0xff]
      %v227 = vld [vmem:[%s219 + $0x8] sm:$0xff]
      %v228 = vld [vmem:[%s219 + $0x10] sm:$0x3]
      %v229 = vld [vmem:[%s219 + $0x1] sm:$0xff]
      %v230 = vld [vmem:[%s219 + $0x9] sm:$0xff]
      %v231 = vld [vmem:[%s219 + $0x11] sm:$0x3]
      %v232 = vld [vmem:[%s219 + $0x2] sm:$0xff]
      %v233 = vld [vmem:[%s219 + $0xa] sm:$0xff]
      %v234 = vld [vmem:[%s219 + $0x12] sm:$0x3]
      %v235 = vpack.c.bf16 %v227, %v226
      %v236 = vpack.c.bf16 %v230, %v229
      %v237 = vpack.c.bf16 %v233, %v232
      %v238 = vpack.c.bf16 %v228, %v228
      %v239 = vpack.c.bf16 %v231, %v231
      %v240 = vpack.c.bf16 %v234, %v234
      %v241 = vld [vmem:[%s1] sm:$0xf]
      %v242 = vld [vmem:[%s1 + $0x4] sm:$0xf]
      %v243 = vld [vmem:[%s1 + $0x8] sm:$0xf]
      %v244 = vld [vmem:[%s1 + $0xc] sm:$0xf]
      %v245 = vld [vmem:[%s1 + $0x10] sm:$0xf]
      %v246 = vld [vmem:[%s1 + $0x14] sm:$0xf]
      %v247 = vld [vmem:[%s1 + $0x18] sm:$0xf]
      %v248 = vld [vmem:[%s1 + $0x1c] sm:$0xf]
      %v249 = vld [vmem:[%s1 + $0x20] sm:$0xf]
      %v250 = vld [vmem:[%s1 + $0x24] sm:$0xf]
      %v251 = vld [vmem:[%s1 + $0x28] sm:$0xf]
      %v252 = vld [vmem:[%s1 + $0x2c] sm:$0xf]
      %v253 = vld [vmem:[%s1 + $0x30] sm:$0xf]
      %v254 = vld [vmem:[%s1 + $0x34] sm:$0xf]
      %v255 = vld [vmem:[%s1 + $0x38] sm:$0xf]
      %v256 = vld [vmem:[%s1 + $0x3c] sm:$0xf]
      %v257 = vld [vmem:[%s1 + $0x40] sm:$0xf]
      %v258 = vld [vmem:[%s1 + $0x44] sm:$0xf]
      %v259 = vld [vmem:[%s1 + $0x48] sm:$0xf]
      %v260 = vld [vmem:[%s1 + $0x4c] sm:$0xf]
      %v261 = vld [vmem:[%s1 + $0x50] sm:$0xf]
      %v262 = vld [vmem:[%s1 + $0x54] sm:$0xf]
      %v263 = vld [vmem:[%s1 + $0x58] sm:$0xf]
      %v264 = vld [vmem:[%s1 + $0x5c] sm:$0xf]
      %v265 = vld [vmem:[%s1 + $0x60] sm:$0xf]
      %v266 = vld [vmem:[%s1 + $0x64] sm:$0xf]
      %v267 = vld [vmem:[%s1 + $0x68] sm:$0xf]
      %v268 = vld [vmem:[%s1 + $0x6c] sm:$0xf]
      %v269 = vld [vmem:[%s1 + $0x70] sm:$0xf]
      %v270 = vld [vmem:[%s1 + $0x74] sm:$0xf]
      %v271 = vld [vmem:[%s1 + $0x78] sm:$0xf]
      %v272 = vld [vmem:[%s1 + $0x7c] sm:$0xf]
      %v273 = vld [vmem:[%s1 + $0x80] sm:$0xf]
      %v274 = vld [vmem:[%s1 + $0x84] sm:$0xf]
      %v275 = vld [vmem:[%s1 + $0x88] sm:$0xf]
      %v276 = vld [vmem:[%s1 + $0x8c] sm:$0xf]
      %v277 = vld [vmem:[%s1 + $0x90] sm:$0xf]
      %v278 = vld [vmem:[%s1 + $0x94] sm:$0xf]
      %v279 = vld [vmem:[%s1 + $0x98] sm:$0xf]
      %v280 = vld [vmem:[%s1 + $0x9c] sm:$0xf]
      %v281 = vld [vmem:[%s1 + $0xa0] sm:$0xf]
      %v282 = vld [vmem:[%s1 + $0xa4] sm:$0xf]
      %v283 = vld [vmem:[%s1 + $0xa8] sm:$0xf]
      %v284 = vld [vmem:[%s1 + $0xac] sm:$0xf]
      %v285 = vld [vmem:[%s1 + $0xb0] sm:$0xf]
      %v286 = vld [vmem:[%s1 + $0xb4] sm:$0xf]
      %v287 = vld [vmem:[%s1 + $0xb8] sm:$0xf]
      %v288 = vld [vmem:[%s1 + $0xbc] sm:$0xf]
      %v337 = vunpack.c.l.b16 %v241
      %v338 = vunpack.c.l.b16 %v242
      %v339 = vunpack.c.l.b16 %v243
      %v340 = vunpack.c.l.b16 %v244
      %v341 = vunpack.c.l.b16 %v245
      %v342 = vunpack.c.l.b16 %v246
      %v343 = vunpack.c.l.b16 %v247
      %v344 = vunpack.c.l.b16 %v248
      %v345 = vunpack.c.l.b16 %v249
      %v346 = vunpack.c.l.b16 %v250
      %v347 = vunpack.c.l.b16 %v251
      %v348 = vunpack.c.l.b16 %v252
      %v349 = vunpack.c.l.b16 %v253
      %v350 = vunpack.c.l.b16 %v254
      %v351 = vunpack.c.l.b16 %v255
      %v352 = vunpack.c.l.b16 %v256
      %v353 = vunpack.c.l.b16 %v257
      %v354 = vunpack.c.l.b16 %v258
      %v355 = vunpack.c.l.b16 %v259
      %v356 = vunpack.c.l.b16 %v260
      %v357 = vunpack.c.l.b16 %v261
      %v358 = vunpack.c.l.b16 %v262
      %v359 = vunpack.c.l.b16 %v263
      %v360 = vunpack.c.l.b16 %v264
      %v361 = vunpack.c.l.b16 %v265
      %v362 = vunpack.c.l.b16 %v266
      %v363 = vunpack.c.l.b16 %v267
      %v364 = vunpack.c.l.b16 %v268
      %v365 = vunpack.c.l.b16 %v269
      %v366 = vunpack.c.l.b16 %v270
      %v367 = vunpack.c.l.b16 %v271
      %v368 = vunpack.c.l.b16 %v272
      %v369 = vunpack.c.l.b16 %v273
      %v370 = vunpack.c.l.b16 %v274
      %v371 = vunpack.c.l.b16 %v275
      %v372 = vunpack.c.l.b16 %v276
      %v373 = vunpack.c.l.b16 %v277
      %v374 = vunpack.c.l.b16 %v278
      %v375 = vunpack.c.l.b16 %v279
      %v376 = vunpack.c.l.b16 %v280
      %v377 = vunpack.c.l.b16 %v281
      %v378 = vunpack.c.l.b16 %v282
      %v379 = vunpack.c.l.b16 %v283
      %v380 = vunpack.c.l.b16 %v284
      %v381 = vunpack.c.l.b16 %v285
      %v382 = vunpack.c.l.b16 %v286
      %v383 = vunpack.c.l.b16 %v287
      %v384 = vunpack.c.l.b16 %v288
      %v385 = vpack.c.b16 %v338, %v337
      %v386 = vpack.c.b16 %v340, %v339
      %v387 = vpack.c.b16 %v342, %v341
      %v388 = vpack.c.b16 %v344, %v343
      %v389 = vpack.c.b16 %v346, %v345
      %v390 = vpack.c.b16 %v348, %v347
      %v391 = vpack.c.b16 %v350, %v349
      %v392 = vpack.c.b16 %v352, %v351
      %v393 = vpack.c.b16 %v354, %v353
      %v394 = vpack.c.b16 %v356, %v355
      %v395 = vpack.c.b16 %v358, %v357
      %v396 = vpack.c.b16 %v360, %v359
      %v397 = vpack.c.b16 %v362, %v361
      %v398 = vpack.c.b16 %v364, %v363
      %v399 = vpack.c.b16 %v366, %v365
      %v400 = vpack.c.b16 %v368, %v367
      %v401 = vpack.c.b16 %v370, %v369
      %v402 = vpack.c.b16 %v372, %v371
      %v403 = vpack.c.b16 %v374, %v373
      %v404 = vpack.c.b16 %v376, %v375
      %v405 = vpack.c.b16 %v378, %v377
      %v406 = vpack.c.b16 %v380, %v379
      %v407 = vpack.c.b16 %v382, %v381
      %v408 = vpack.c.b16 %v384, %v383
      %433 = vmatprep.subr.bf16.mxu0 0
      %434 = vmatpush1.bf16.msra.mxu0 %v392
      %435 = vmatprep.subr.bf16.mxu0 0
      %436 = vmatpush1.bf16.msra.mxu0 %v391
      %437 = vmatprep.subr.bf16.mxu0 0
      %438 = vmatpush1.bf16.msra.mxu0 %v390
      %439 = vmatprep.subr.bf16.mxu0 0
      %440 = vmatpush1.bf16.msra.mxu0 %v389
      %441 = vmatprep.subr.bf16.mxu0 0
      %442 = vmatpush1.bf16.msra.mxu0 %v388
      %443 = vmatprep.subr.bf16.mxu0 0
      %444 = vmatpush1.bf16.msra.mxu0 %v387
      %445 = vmatprep.subr.bf16.mxu0 0
      %446 = vmatpush1.bf16.msra.mxu0 %v386
      %447 = vmatprep.subr.bf16.mxu0 0
      %448 = vmatpush1.bf16.msra.mxu0 %v385
      %449 = vmatprep.subr.bf16.mxu0 0
      %450 = vmatpush2.bf16.msra.mxu0 %v400
      %451 = vmatprep.subr.bf16.mxu0 0
      %452 = vmatpush2.bf16.msra.mxu0 %v399
      %453 = vmatprep.subr.bf16.mxu0 0
      %454 = vmatpush2.bf16.msra.mxu0 %v398
      %455 = vmatprep.subr.bf16.mxu0 0
      %456 = vmatpush2.bf16.msra.mxu0 %v397
      %457 = vmatprep.subr.bf16.mxu0 0
      %458 = vmatpush2.bf16.msra.mxu0 %v396
      %459 = vmatprep.subr.bf16.mxu0 0
      %460 = vmatpush2.bf16.msra.mxu0 %v395
      %461 = vmatprep.subr.bf16.mxu0 0
      %462 = vmatpush2.bf16.msra.mxu0 %v394
      %463 = vmatprep.subr.bf16.mxu0 0
      %464 = vmatpush2.bf16.msra.mxu0 %v393
      %465 = vmatprep.mubr.bf16.mxu0 %v236
      %466 = vmatmul.mubr.bf16.gmra.mxu0 %v235
      %v467 = vpop.f32.mrf.mxu0
      %v468 = vadd.f32 0.0, %v467
      %v469 = vpop.f32.mrf.mxu0
      %v470 = vpop.f32.mrf.mxu0
      %v471 = vadd.f32 0.0, %v470
      %v472 = vpop.f32.mrf.mxu0
      %473 = vmatprep.mubr.bf16.mxu0 %v239
      %474 = vmatmul.mubr.bf16.gmra.mxu0 %v238
      %v475 = vpop.f32.mrf.mxu0
      %v476 = vadd.f32 0.0, %v475
      %v477 = vpop.f32.mrf.mxu0
      %v478 = vpop.f32.mrf.mxu0
      %v479 = vpop.f32.mrf.mxu0
      %480 = vdwg.mxu0
      %481 = vmatprep.subr.bf16.mxu0 0
      %482 = vmatpush1.bf16.msra.mxu0 %v408
      %483 = vmatprep.subr.bf16.mxu0 0
      %484 = vmatpush1.bf16.msra.mxu0 %v407
      %485 = vmatprep.subr.bf16.mxu0 0
      %486 = vmatpush1.bf16.msra.mxu0 %v406
      %487 = vmatprep.subr.bf16.mxu0 0
      %488 = vmatpush1.bf16.msra.mxu0 %v405
      %489 = vmatprep.subr.bf16.mxu0 0
      %490 = vmatpush1.bf16.msra.mxu0 %v404
      %491 = vmatprep.subr.bf16.mxu0 0
      %492 = vmatpush1.bf16.msra.mxu0 %v403
      %493 = vmatprep.subr.bf16.mxu0 0
      %494 = vmatpush1.bf16.msra.mxu0 %v402
      %495 = vmatprep.subr.bf16.mxu0 0
      %496 = vmatpush1.bf16.msra.mxu0 %v401
      %497 = vmatprep.subr.bf16.mxu0 0
      %498 = vmatpush2.bf16.msra.mxu0 0
      %499 = vmatprep.subr.bf16.mxu0 0
      %500 = vmatpush2.bf16.msra.mxu0 0
      %501 = vmatprep.subr.bf16.mxu0 0
      %502 = vmatpush2.bf16.msra.mxu0 0
      %503 = vmatprep.subr.bf16.mxu0 0
      %504 = vmatpush2.bf16.msra.mxu0 0
      %505 = vmatprep.subr.bf16.mxu0 0
      %506 = vmatpush2.bf16.msra.mxu0 0
      %507 = vmatprep.subr.bf16.mxu0 0
      %508 = vmatpush2.bf16.msra.mxu0 0
      %509 = vmatprep.subr.bf16.mxu0 0
      %510 = vmatpush2.bf16.msra.mxu0 0
      %511 = vmatprep.subr.bf16.mxu0 0
      %512 = vmatpush2.bf16.msra.mxu0 0
      %513 = vmatprep.mubr.bf16.mxu0 0
      %514 = vmatmul.mubr.bf16.gmra.mxu0 %v237
      %v515 = vpop.f32.mrf.mxu0
      %v516 = vadd.f32 %v468, %v515
      %v517 = vpop.f32.mrf.mxu0
      %v518 = vpop.f32.mrf.mxu0
      %v519 = vadd.f32 %v471, %v518
      %v520 = vpop.f32.mrf.mxu0
      %521 = vmatprep.mubr.bf16.mxu0 0
      %522 = vmatmul.mubr.bf16.gmra.mxu0 %v240
      %v523 = vpop.f32.mrf.mxu0
      %v524 = vadd.f32 %v476, %v523
      %v525 = vpop.f32.mrf.mxu0
      %v526 = vpop.f32.mrf.mxu0
      %v527 = vpop.f32.mrf.mxu0
      %528 = vdwg.mxu0
      %v529 = vld [vmem:[%s2] sm:$0x1]
      %v530 = vlaneseq
      %v531 = vshrl.u32 %v530, 7
      %v532 = vsub.s32 0, %v531
      %v533 = vrot.slane %v529, %v532
      %v534 = vmul.f32 %v516, %v533
      %v535 = vmul.f32 %v519, %v533
      %v536 = vmul.f32 %v524, %v533
      %v537 = vld [vmem:[%s2 + $0x1] sm:$0x1]
      %v538 = vlaneseq
      %v539 = vshrl.u32 %v538, 7
      %v540 = vsub.s32 0, %v539
      %v541 = vrot.slane %v537, %v540
      %v542 = vadd.f32 %v534, %v541
      %v543 = vadd.f32 %v535, %v541
      %v544 = vadd.f32 %v536, %v541
      %v545 = vmax.f32 %v542, 0.0
      %v546 = vmax.f32 %v543, 0.0
      %v547 = vmax.f32 %v544, 0.0
      %v548 = vlaneseq
      %v549 = vshrl.u32 %v548, 7
      %v550 = vadd.s32 %v549, 8
      %v551 = vadd.s32 %v549, 16
      %vm552 = vcmp.ge.s32.totalorder %v549, 1
      %vm553 = vcmp.ge.s32.totalorder %v550, 1
      %vm554 = vcmp.ge.s32.totalorder %v551, 1
      %vm555 = vcmp.le.s32.totalorder %v549, 16
      %vm556 = vcmp.le.s32.totalorder %v550, 16
      %vm557 = vcmp.le.s32.totalorder %v551, 16
      %vm558 = vmand %vm552, %vm555
      %vm559 = vmand %vm553, %vm556
      %vm560 = vmand %vm554, %vm557
      %v561 = vsel %vm558, %v545, 0.0
      %v562 = vsel %vm559, %v546, 0.0
      %v563 = vsel %vm560, %v547, 0.0
      %vm567 = vcmask 1046528
      %v568 = vrot.slane %v561, 1
      %v569 = vrot.slane %v562, 1
      %v570 = vsel %vm567, %v568, %v569
      %v571 = vrot.slane %v563, 1
      %v572 = vsel %vm567, %v569, %v571
      %vm575 = vcmask 1045504
      %v576 = vrot.slane %v561, 2
      %v577 = vrot.slane %v562, 2
      %v578 = vsel %vm575, %v576, %v577
      %v579 = vrot.slane %v563, 2
      %v580 = vsel %vm575, %v577, %v579
      %v583 = vpack.c.bf16 %v562, %v561
      %v584 = vpack.c.bf16 %v572, %v570
      %v585 = vpack.c.bf16 %v580, %v578
      %v586 = vld [vmem:[%s3] sm:$0xf]
      %v587 = vld [vmem:[%s3 + $0x4] sm:$0xf]
      %v588 = vld [vmem:[%s3 + $0x8] sm:$0xf]
      %v589 = vld [vmem:[%s3 + $0xc] sm:$0xf]
      %v590 = vld [vmem:[%s3 + $0x10] sm:$0xf]
      %v591 = vld [vmem:[%s3 + $0x14] sm:$0xf]
      %v592 = vld [vmem:[%s3 + $0x18] sm:$0xf]
      %v593 = vld [vmem:[%s3 + $0x1c] sm:$0xf]
      %v594 = vld [vmem:[%s3 + $0x20] sm:$0xf]
      %v595 = vld [vmem:[%s3 + $0x24] sm:$0xf]
      %v596 = vld [vmem:[%s3 + $0x28] sm:$0xf]
      %v597 = vld [vmem:[%s3 + $0x2c] sm:$0xf]
      %v598 = vld [vmem:[%s3 + $0x30] sm:$0xf]
      %v599 = vld [vmem:[%s3 + $0x34] sm:$0xf]
      %v600 = vld [vmem:[%s3 + $0x38] sm:$0xf]
      %v601 = vld [vmem:[%s3 + $0x3c] sm:$0xf]
      %v602 = vld [vmem:[%s3 + $0x40] sm:$0xf]
      %v603 = vld [vmem:[%s3 + $0x44] sm:$0xf]
      %v604 = vld [vmem:[%s3 + $0x48] sm:$0xf]
      %v605 = vld [vmem:[%s3 + $0x4c] sm:$0xf]
      %v606 = vld [vmem:[%s3 + $0x50] sm:$0xf]
      %v607 = vld [vmem:[%s3 + $0x54] sm:$0xf]
      %v608 = vld [vmem:[%s3 + $0x58] sm:$0xf]
      %v609 = vld [vmem:[%s3 + $0x5c] sm:$0xf]
      %v610 = vld [vmem:[%s3 + $0x60] sm:$0xf]
      %v611 = vld [vmem:[%s3 + $0x64] sm:$0xf]
      %v612 = vld [vmem:[%s3 + $0x68] sm:$0xf]
      %v613 = vld [vmem:[%s3 + $0x6c] sm:$0xf]
      %v614 = vld [vmem:[%s3 + $0x70] sm:$0xf]
      %v615 = vld [vmem:[%s3 + $0x74] sm:$0xf]
      %v616 = vld [vmem:[%s3 + $0x78] sm:$0xf]
      %v617 = vld [vmem:[%s3 + $0x7c] sm:$0xf]
      %v618 = vld [vmem:[%s3 + $0x80] sm:$0xf]
      %v619 = vld [vmem:[%s3 + $0x84] sm:$0xf]
      %v620 = vld [vmem:[%s3 + $0x88] sm:$0xf]
      %v621 = vld [vmem:[%s3 + $0x8c] sm:$0xf]
      %v622 = vld [vmem:[%s3 + $0x90] sm:$0xf]
      %v623 = vld [vmem:[%s3 + $0x94] sm:$0xf]
      %v624 = vld [vmem:[%s3 + $0x98] sm:$0xf]
      %v625 = vld [vmem:[%s3 + $0x9c] sm:$0xf]
      %v626 = vld [vmem:[%s3 + $0xa0] sm:$0xf]
      %v627 = vld [vmem:[%s3 + $0xa4] sm:$0xf]
      %v628 = vld [vmem:[%s3 + $0xa8] sm:$0xf]
      %v629 = vld [vmem:[%s3 + $0xac] sm:$0xf]
      %v630 = vld [vmem:[%s3 + $0xb0] sm:$0xf]
      %v631 = vld [vmem:[%s3 + $0xb4] sm:$0xf]
      %v632 = vld [vmem:[%s3 + $0xb8] sm:$0xf]
      %v633 = vld [vmem:[%s3 + $0xbc] sm:$0xf]
      %v682 = vunpack.c.l.b16 %v586
      %v683 = vunpack.c.l.b16 %v587
      %v684 = vunpack.c.l.b16 %v588
      %v685 = vunpack.c.l.b16 %v589
      %v686 = vunpack.c.l.b16 %v590
      %v687 = vunpack.c.l.b16 %v591
      %v688 = vunpack.c.l.b16 %v592
      %v689 = vunpack.c.l.b16 %v593
      %v690 = vunpack.c.l.b16 %v594
      %v691 = vunpack.c.l.b16 %v595
      %v692 = vunpack.c.l.b16 %v596
      %v693 = vunpack.c.l.b16 %v597
      %v694 = vunpack.c.l.b16 %v598
      %v695 = vunpack.c.l.b16 %v599
      %v696 = vunpack.c.l.b16 %v600
      %v697 = vunpack.c.l.b16 %v601
      %v698 = vunpack.c.l.b16 %v602
      %v699 = vunpack.c.l.b16 %v603
      %v700 = vunpack.c.l.b16 %v604
      %v701 = vunpack.c.l.b16 %v605
      %v702 = vunpack.c.l.b16 %v606
      %v703 = vunpack.c.l.b16 %v607
      %v704 = vunpack.c.l.b16 %v608
      %v705 = vunpack.c.l.b16 %v609
      %v706 = vunpack.c.l.b16 %v610
      %v707 = vunpack.c.l.b16 %v611
      %v708 = vunpack.c.l.b16 %v612
      %v709 = vunpack.c.l.b16 %v613
      %v710 = vunpack.c.l.b16 %v614
      %v711 = vunpack.c.l.b16 %v615
      %v712 = vunpack.c.l.b16 %v616
      %v713 = vunpack.c.l.b16 %v617
      %v714 = vunpack.c.l.b16 %v618
      %v715 = vunpack.c.l.b16 %v619
      %v716 = vunpack.c.l.b16 %v620
      %v717 = vunpack.c.l.b16 %v621
      %v718 = vunpack.c.l.b16 %v622
      %v719 = vunpack.c.l.b16 %v623
      %v720 = vunpack.c.l.b16 %v624
      %v721 = vunpack.c.l.b16 %v625
      %v722 = vunpack.c.l.b16 %v626
      %v723 = vunpack.c.l.b16 %v627
      %v724 = vunpack.c.l.b16 %v628
      %v725 = vunpack.c.l.b16 %v629
      %v726 = vunpack.c.l.b16 %v630
      %v727 = vunpack.c.l.b16 %v631
      %v728 = vunpack.c.l.b16 %v632
      %v729 = vunpack.c.l.b16 %v633
      %v730 = vpack.c.b16 %v683, %v682
      %v731 = vpack.c.b16 %v685, %v684
      %v732 = vpack.c.b16 %v687, %v686
      %v733 = vpack.c.b16 %v689, %v688
      %v734 = vpack.c.b16 %v691, %v690
      %v735 = vpack.c.b16 %v693, %v692
      %v736 = vpack.c.b16 %v695, %v694
      %v737 = vpack.c.b16 %v697, %v696
      %v738 = vpack.c.b16 %v699, %v698
      %v739 = vpack.c.b16 %v701, %v700
      %v740 = vpack.c.b16 %v703, %v702
      %v741 = vpack.c.b16 %v705, %v704
      %v742 = vpack.c.b16 %v707, %v706
      %v743 = vpack.c.b16 %v709, %v708
      %v744 = vpack.c.b16 %v711, %v710
      %v745 = vpack.c.b16 %v713, %v712
      %v746 = vpack.c.b16 %v715, %v714
      %v747 = vpack.c.b16 %v717, %v716
      %v748 = vpack.c.b16 %v719, %v718
      %v749 = vpack.c.b16 %v721, %v720
      %v750 = vpack.c.b16 %v723, %v722
      %v751 = vpack.c.b16 %v725, %v724
      %v752 = vpack.c.b16 %v727, %v726
      %v753 = vpack.c.b16 %v729, %v728
      %778 = vmatprep.subr.bf16.mxu0 0
      %779 = vmatpush1.bf16.msra.mxu0 %v737
      %780 = vmatprep.subr.bf16.mxu0 0
      %781 = vmatpush1.bf16.msra.mxu0 %v736
      %782 = vmatprep.subr.bf16.mxu0 0
      %783 = vmatpush1.bf16.msra.mxu0 %v735
      %784 = vmatprep.subr.bf16.mxu0 0
      %785 = vmatpush1.bf16.msra.mxu0 %v734
      %786 = vmatprep.subr.bf16.mxu0 0
      %787 = vmatpush1.bf16.msra.mxu0 %v733
      %788 = vmatprep.subr.bf16.mxu0 0
      %789 = vmatpush1.bf16.msra.mxu0 %v732
      %790 = vmatprep.subr.bf16.mxu0 0
      %791 = vmatpush1.bf16.msra.mxu0 %v731
      %792 = vmatprep.subr.bf16.mxu0 0
      %793 = vmatpush1.bf16.msra.mxu0 %v730
      %794 = vmatprep.subr.bf16.mxu0 0
      %795 = vmatpush2.bf16.msra.mxu0 %v745
      %796 = vmatprep.subr.bf16.mxu0 0
      %797 = vmatpush2.bf16.msra.mxu0 %v744
      %798 = vmatprep.subr.bf16.mxu0 0
      %799 = vmatpush2.bf16.msra.mxu0 %v743
      %800 = vmatprep.subr.bf16.mxu0 0
      %801 = vmatpush2.bf16.msra.mxu0 %v742
      %802 = vmatprep.subr.bf16.mxu0 0
      %803 = vmatpush2.bf16.msra.mxu0 %v741
      %804 = vmatprep.subr.bf16.mxu0 0
      %805 = vmatpush2.bf16.msra.mxu0 %v740
      %806 = vmatprep.subr.bf16.mxu0 0
      %807 = vmatpush2.bf16.msra.mxu0 %v739
      %808 = vmatprep.subr.bf16.mxu0 0
      %809 = vmatpush2.bf16.msra.mxu0 %v738
      %810 = vmatprep.mubr.bf16.mxu0 %v584
      %811 = vmatmul.mubr.bf16.gmra.mxu0 %v583
      %v812 = vpop.f32.mrf.mxu0
      %v813 = vadd.f32 0.0, %v812
      %v814 = vpop.f32.mrf.mxu0
      %v815 = vpop.f32.mrf.mxu0
      %v816 = vadd.f32 0.0, %v815
      %v817 = vpop.f32.mrf.mxu0
      %818 = vdwg.mxu0
      %819 = vmatprep.subr.bf16.mxu0 0
      %820 = vmatpush1.bf16.msra.mxu0 %v753
      %821 = vmatprep.subr.bf16.mxu0 0
      %822 = vmatpush1.bf16.msra.mxu0 %v752
      %823 = vmatprep.subr.bf16.mxu0 0
      %824 = vmatpush1.bf16.msra.mxu0 %v751
      %825 = vmatprep.subr.bf16.mxu0 0
      %826 = vmatpush1.bf16.msra.mxu0 %v750
      %827 = vmatprep.subr.bf16.mxu0 0
      %828 = vmatpush1.bf16.msra.mxu0 %v749
      %829 = vmatprep.subr.bf16.mxu0 0
      %830 = vmatpush1.bf16.msra.mxu0 %v748
      %831 = vmatprep.subr.bf16.mxu0 0
      %832 = vmatpush1.bf16.msra.mxu0 %v747
      %833 = vmatprep.subr.bf16.mxu0 0
      %834 = vmatpush1.bf16.msra.mxu0 %v746
      %835 = vmatprep.subr.bf16.mxu0 0
      %836 = vmatpush2.bf16.msra.mxu0 0
      %837 = vmatprep.subr.bf16.mxu0 0
      %838 = vmatpush2.bf16.msra.mxu0 0
      %839 = vmatprep.subr.bf16.mxu0 0
      %840 = vmatpush2.bf16.msra.mxu0 0
      %841 = vmatprep.subr.bf16.mxu0 0
      %842 = vmatpush2.bf16.msra.mxu0 0
      %843 = vmatprep.subr.bf16.mxu0 0
      %844 = vmatpush2.bf16.msra.mxu0 0
      %845 = vmatprep.subr.bf16.mxu0 0
      %846 = vmatpush2.bf16.msra.mxu0 0
      %847 = vmatprep.subr.bf16.mxu0 0
      %848 = vmatpush2.bf16.msra.mxu0 0
      %849 = vmatprep.subr.bf16.mxu0 0
      %850 = vmatpush2.bf16.msra.mxu0 0
      %851 = vmatprep.mubr.bf16.mxu0 0
      %852 = vmatmul.mubr.bf16.gmra.mxu0 %v585
      %v853 = vpop.f32.mrf.mxu0
      %v854 = vadd.f32 %v813, %v853
      %v855 = vpop.f32.mrf.mxu0
      %v856 = vpop.f32.mrf.mxu0
      %v857 = vadd.f32 %v816, %v856
      %v858 = vpop.f32.mrf.mxu0
      %859 = vdwg.mxu0
      %v860 = vld [vmem:[%s4] sm:$0x1]
      %v861 = vlaneseq
      %v862 = vshrl.u32 %v861, 7
      %v863 = vsub.s32 0, %v862
      %v864 = vrot.slane %v860, %v863
      %v865 = vmul.f32 %v854, %v864
      %v866 = vmul.f32 %v857, %v864
      %v867 = vld [vmem:[%s4 + $0x1] sm:$0x1]
      %v868 = vlaneseq
      %v869 = vshrl.u32 %v868, 7
      %v870 = vsub.s32 0, %v869
      %v871 = vrot.slane %v867, %v870
      %v872 = vadd.f32 %v865, %v871
      %v873 = vadd.f32 %v866, %v871
      %v874 = vadd.f32 %v872, %v232
      %v875 = vadd.f32 %v873, %v233
      %v876 = vmax.f32 %v874, 0.0
      %v877 = vmax.f32 %v875, 0.0
      %878 = vst [vmem:[%s224] sm:$0xff] %v876
      %879 = vst [vmem:[%s224 + $0x8] sm:$0xff] %v877
      %p880 = scmp.lt.s32.totalorder %s16, 1
      %s881 = scalar_select %p880, %s16, 1
      %s882 = smul.addr %s881, 2
      %s883 = smul.addr %s882, 8
      %s884 = scalar_lea.vmem %s5, %s883
      // Predicated region
      $region41: #{basic_block_forward.1} parent=39 // pred_check
        %p885 = pneg %p144
      $region42: #{basic_block_forward.1} parent=39 // pred_check_branch
        %887 = sbr.rel (%p885) target = $region44
      $region43: #{basic_block_forward.1} parent=39 // pred_region
        _
      $region44: #{basic_block_forward.1} parent=39 // pred_fallthru
        _
    $region40: #{basic_block_forward.1} parent=5 // pred_fallthru
      _
    %p888 = scmp.le.s32.totalorder 2, %s11
    // Predicated region
    $region45: #{basic_block_forward.1} parent=5 // pred_check
      %p889 = pneg %p888
    $region46: #{basic_block_forward.1} parent=5 // pred_check_branch
      %891 = sbr.rel (%p889) target = $region48
    $region47: #{basic_block_forward.1} parent=5 // pred_region
      %s892 = ssub.s32 %s11, 2
      // Predicated region
      $region49: #{basic_block_forward.1} parent=47 // pred_check
        %p893 = pneg %p150
      $region50: #{basic_block_forward.1} parent=47 // pred_check_branch
        %895 = sbr.rel (%p893) target = $region52
      $region51: #{basic_block_forward.1} parent=47 // pred_region
        %p896 = scmp.lt.s32.totalorder %s17, 1
        %s897 = scalar_select %p896, %s17, 1
        %s898 = smul.addr %s897, 2
        %s899 = smul.addr %s898, 8
        %s900 = scalar_lea.vmem %s5, %s899
      $region52: #{basic_block_forward.1} parent=47 // pred_fallthru
        _
    $region48: #{basic_block_forward.1} parent=5 // pred_fallthru
      _
  $region6: #{basic_block_forward.1} parent=0 // loop_footer
    %s15 = sadd.s32 1, %s11
  $region7: #{basic_block_forward.1} parent=0 // loop_footer_branch
    %10 = sbr.rel target = $region3
  $region8: #{basic_block_forward.1} parent=0 // loop_exit
    _

</llo_original>
